<compile_context>
chip_gen: v7x
topology: tpu7x:2x2x1
jax: 0.10.0
libtpu: 0.0.40
codegen_flags: <defaults>
</compile_context>

<pallas_src>
import math

import jax
import jax.numpy as jnp
from jax.experimental import pallas as pl
from jax.experimental.pallas import tpu as pltpu

_LANE = 128


def make_positional_encoding(d_model: int, sequence_length: int,
                             dtype=jnp.float32) -> jnp.ndarray:
    """Standard sinusoidal PE table (sequence_length, d_model), built once in `dtype`."""
    position = jnp.arange(sequence_length, dtype=jnp.float32)[:, None]          # (S, 1)
    div_term = jnp.exp(
        jnp.arange(0, d_model, 2, dtype=jnp.float32) * (-math.log(10000.0) / d_model)
    )
    angles = position * div_term                                                 # (S, ceil(D/2))
    pe = jnp.zeros((sequence_length, d_model), dtype=jnp.float32)
    pe = pe.at[:, 0::2].set(jnp.sin(angles))
    pe = pe.at[:, 1::2].set(jnp.cos(angles[:, : d_model // 2]))                  # odd-D safe
    return pe.astype(dtype)


def _make_kernel(training: bool, dropout_p: float, rows_per_batch: int):
    """Kernel body over a (TR, L) tile: add, optionally fused with inverted dropout."""
    if (not training) or dropout_p <= 0.0:
        def kernel(seed_ref, x_ref, pe_ref, o_ref):
            del seed_ref  # unused in eval mode
            o_ref[...] = x_ref[...] + pe_ref[...]
        return kernel

    thr = min(int(round(dropout_p * 4294967296.0)), 4294967295)  # P(drop) = thr / 2^32
    inv_keep = 1.0 / (1.0 - dropout_p)

    def kernel(seed_ref, x_ref, pe_ref, o_ref):
        y = x_ref[...] + pe_ref[...]
        tr, lane = y.shape
        # Counter-based hash (splitmix32) on the global element index.  Portable 32-bit
        # VPU ops only; mask depends on (seed, element index), not on tiling.
        r = pl.program_id(0).astype(jnp.uint32)
        b = pl.program_id(1).astype(jnp.uint32)
        row0 = b * jnp.uint32(rows_per_batch) + r * jnp.uint32(tr)
        rows = jax.lax.broadcasted_iota(jnp.int32, (tr, lane), 0).astype(jnp.uint32)
        cols = jax.lax.broadcasted_iota(jnp.int32, (tr, lane), 1).astype(jnp.uint32)
        idx = (row0 + rows) * jnp.uint32(lane) + cols
        h = idx ^ (seed_ref[0].astype(jnp.uint32) * jnp.uint32(0x9E3779B9))
        h = (h ^ (h >> 16)) * jnp.uint32(0x85EBCA6B)
        h = (h ^ (h >> 13)) * jnp.uint32(0xC2B2AE35)
        h = h ^ (h >> 16)
        keep = h >= jnp.uint32(thr)
        # Mask + scale in f32, single cast at the store (avoids bf16 1/(1-p) bias).
        scaled = y.astype(jnp.float32) * jnp.float32(inv_keep)
        o_ref[...] = jnp.where(keep, scaled, 0.0).astype(o_ref.dtype)

    return kernel


def _choose_row_tile(num_rows: int, lane: int, itemsize: int,
                     target_bytes: int = 4 << 20) -> int:
    """Rows per block: ~4 MiB lane-dense tiles, multiple of 8 rows, preferring a tile
    size that divides num_rows exactly (no ragged tail -> no masked partial stores)."""
    rows_target = max(8, target_bytes // max(1, lane * itemsize))
    if num_rows <= rows_target:
        return num_rows
    cand = (rows_target // 8) * 8
    t = cand
    while t >= 8:
        if num_rows % t == 0:
            return t
        t -= 8
    return cand  # ragged-tail fallback; block itself is still a multiple of 8 rows


def positional_encoding_forward(x: jnp.ndarray, pe: jnp.ndarray,
                                dropout_p: float = 0.1, *,
                                training: bool = False, seed: int = 0) -> jnp.ndarray:
    """x: (B, S, D); pe: (S_max, D) precomputed table (ideally already in x.dtype).
    Returns dropout(x + pe[:S]) (inverted dropout when training, identity otherwise)."""
    B, S, D = x.shape
    S_max, D_pe = pe.shape
    assert D_pe == D and S <= S_max
    if pe.dtype != x.dtype:
        # Fallback; callers should build the table in the activation dtype once (see main).
        pe = pe.astype(x.dtype)

    total = S * D
    pad = 0
    if total % _LANE == 0:
        # Lane-dense fold: (S, D) -> (R, 128) so every store is an unmasked 128-wide vst.
        L = _LANE
        R = total // L
        x_v = x.reshape(B, R, L)
        if (S_max * D) % L == 0:
            pe_v = pe.reshape(-1, L)          # full table, no per-call slice/copy
        else:
            pe_v = pe[:S].reshape(R, L)
    else:
        # Pad the flattened per-batch length up to a multiple of 128 so stores stay
        # unmasked; unpad after the call.
        L = _LANE
        R = pl.cdiv(total, L)
        pad = R * L - total
        x_v = jnp.pad(x.reshape(B, total), ((0, 0), (0, pad))).reshape(B, R, L)
        pe_v = jnp.pad(pe[:S].reshape(total), (0, pad)).reshape(R, L)

    itemsize = jnp.dtype(x.dtype).itemsize
    TR = _choose_row_tile(R, L, itemsize)
    n_r = pl.cdiv(R, TR)
    # Keep >= 2 grid steps on the parallel row axis when B == 1 so both v7x TCs get work.
    if B == 1 and n_r == 1 and R >= 16:
        TR = max(8, ((R // 2) // 8) * 8)
        n_r = pl.cdiv(R, TR)
    # (8,128) rule: if the PE view has more rows than R and the tile is not a multiple of
    # 8 rows, slice it so the block spans the full array.
    if pe_v.shape[0] != R and TR % 8 != 0:
        pe_v = pe_v[:R]

    # Batch innermost: PE block index (r, 0) is unchanged across consecutive b steps, so
    # Pallas skips re-DMA-ing the PE tile once per batch.
    grid = (n_r, B)
    seed_arr = jnp.asarray([seed], dtype=jnp.int32)

    out_v = pl.pallas_call(
        _make_kernel(training, float(dropout_p), R),
        out_shape=jax.ShapeDtypeStruct((B, R, L), x.dtype),
        grid_spec=pltpu.PrefetchScalarGridSpec(
            num_scalar_prefetch=1,                         # dropout seed lives in SMEM
            grid=grid,
            in_specs=[
                # batch dim squeezed -> plain 2-D (TR, L) add, no in-kernel broadcast
                pl.BlockSpec((pl.Squeezed(), TR, L), lambda r, b, seed: (b, r, 0)),
                pl.BlockSpec((TR, L), lambda r, b, seed: (r, 0)),   # shared PE tile
            ],
            out_specs=pl.BlockSpec((pl.Squeezed(), TR, L), lambda r, b, seed: (b, r, 0)),
        ),
        compiler_params=pltpu.CompilerParams(
            dimension_semantics=("parallel", "parallel"),
            vmem_limit_bytes=48 * 1024 * 1024,   # 4 MiB tiles * 3 arrays * double-buffer ~ 24 MiB
        ),
    )(seed_arr, x_v, pe_v)

    if pad:
        return out_v.reshape(B, R * L)[:, :total].reshape(B, S, D)
    return out_v.reshape(B, S, D)


if __name__ == "__main__":
    batch, seq, d_model = 2, 8, 32
    sequence_length = 16          # buffer length >= seq, as in the module
    dropout_p = 0.1

    key = jax.random.PRNGKey(0)
    x = jax.random.normal(key, (batch, seq, d_model), dtype=jnp.float32)
    # PE table built once in the activation dtype (analogue of the registered buffer).
    pe = make_positional_encoding(d_model, sequence_length, dtype=x.dtype)

    # Eval path (dropout = identity): exact check against plain-JAX reference.
    out = positional_encoding_forward(x, pe, dropout_p, training=False)
    out = jax.block_until_ready(out)
    ref = x + pe[:seq, :][None, :, :].astype(x.dtype)
    assert out.shape == x.shape and out.dtype == x.dtype
    assert jnp.allclose(out, ref, atol=1e-6), "eval-mode mismatch vs reference"

    # Training path: fused inverted dropout on the same tile (no second HBM pass).
    out_tr = positional_encoding_forward(x, pe, dropout_p, training=True, seed=1234)
    out_tr = jax.block_until_ready(out_tr)
    scaled = ref / (1.0 - dropout_p)
    dropped = jnp.isclose(out_tr, 0.0, atol=1e-6)
    kept_ok = jnp.isclose(out_tr, scaled, rtol=1e-5, atol=1e-5)
    assert bool(jnp.all(dropped | kept_ok)), "training-mode dropout produced unexpected values"
    frac = float(jnp.mean(dropped.astype(jnp.float32)))
    assert 0.0 < frac < 0.3, f"dropout fraction {frac} far from p={dropout_p}"

    print("KERNEL_OK")
</pallas_src>

<mosaic_0001>
module attributes {stable_mosaic.version = 11 : i64} {
  func.func @kernel(%arg0: i32, %arg1: i32, %arg2: memref<1xi32, #tpu.memory_space<smem>>, %arg3: memref<1x2x128xf32, #tpu.memory_space<vmem>>, %arg4: memref<2x128xf32, #tpu.memory_space<vmem>>, %arg5: memref<1x2x128xf32, #tpu.memory_space<vmem>>) attributes {dimension_semantics = [#tpu.dimension_semantics<parallel>, #tpu.dimension_semantics<parallel>], iteration_bounds = array<i64: 1, 2>, scalar_prefetch = 1 : i64, scratch_operands = 0 : i64, tpu.core_type = #tpu.core_type<tc>, window_params = [{transform_indices = @transform_0, window_bounds = array<i64: 1, 2, 128>}, {transform_indices = @transform_1, window_bounds = array<i64: 2, 128>}, {transform_indices = @transform_2, window_bounds = array<i64: 1, 2, 128>}]} {
    %c0 = arith.constant 0 : index
    %c0_0 = arith.constant 0 : index
    %c0_1 = arith.constant 0 : index
    %0 = vector.load %arg3[%c0, %c0_0, %c0_1] : memref<1x2x128xf32, #tpu.memory_space<vmem>>, vector<1x2x128xf32>
    %1 = vector.shape_cast %0 : vector<1x2x128xf32> to vector<2x128xf32>
    %c0_2 = arith.constant 0 : index
    %c0_3 = arith.constant 0 : index
    %2 = vector.load %arg4[%c0_2, %c0_3] : memref<2x128xf32, #tpu.memory_space<vmem>>, vector<2x128xf32>
    %3 = arith.addf %1, %2 : vector<2x128xf32>
    %c0_4 = arith.constant 0 : index
    %c0_5 = arith.constant 0 : index
    %c0_6 = arith.constant 0 : index
    %4 = vector.load %arg5[%c0_4, %c0_5, %c0_6] : memref<1x2x128xf32, #tpu.memory_space<vmem>>, vector<1x2x128xf32>
    %5 = vector.shape_cast %4 : vector<1x2x128xf32> to vector<2x128xf32>
    %6 = vector.shape_cast %3 : vector<2x128xf32> to vector<1x2x128xf32>
    tpu.vector_store %arg5[%c0_4, %c0_5, %c0_6], %6 {strides = array<i32>} : memref<1x2x128xf32, #tpu.memory_space<vmem>>, vector<1x2x128xf32>,
    return
  }
  func.func @transform_0(%arg0: i32, %arg1: i32, %arg2: memref<1xi32, #tpu.memory_space<smem>>) -> (i32, i32, i32) {
    %c0_i32 = arith.constant 0 : i32
    %c0_i32_0 = arith.constant 0 : i32
    return %arg1, %arg0, %c0_i32 : i32, i32, i32
  }
  func.func @transform_1(%arg0: i32, %arg1: i32, %arg2: memref<1xi32, #tpu.memory_space<smem>>) -> (i32, i32) {
    %c0_i32 = arith.constant 0 : i32
    %c0_i32_0 = arith.constant 0 : i32
    return %arg0, %c0_i32 : i32, i32
  }
  func.func @transform_2(%arg0: i32, %arg1: i32, %arg2: memref<1xi32, #tpu.memory_space<smem>>) -> (i32, i32, i32) {
    %c0_i32 = arith.constant 0 : i32
    %c0_i32_0 = arith.constant 0 : i32
    return %arg1, %arg0, %c0_i32 : i32, i32, i32
  }
}

</mosaic_0001>

<llo_original>
// kernel: tpu_custom_call.1
$region0: #{tpu_custom_call.1}
  #allocation0 [shape = 'u32[]', space=smem, size = 0x4, offset = 0x4, fixed_abs, tag = 'smem constant byte address 0x4 - core index']
  #allocation1 [shape = 'u32[144,128]{1,0:T(1,128)}', space=vmem, size = 0x12000, scoped, tag = 'internal scratch']
  #allocation2 [shape = 's32[1]{0}', space=sflag, size = 0x4, scoped, tag = 'scoped memory for tpu_custom_call.1']
  #allocation3 [shape = 's32[1]{0:T(128)S(6)}', space=smem, size = 0x200, scoped, tag = 'prefetched SMEM operand 0']
  %s0 = inlined_call_operand.<no memory space> [shape: s32[1], index: 0, kind: input, shape index: {}]
  %s1 = inlined_call_operand.hbm [shape: f32[2,2,128], index: 1, kind: input, shape index: {}]
  %s2 = inlined_call_operand.vmem [shape: f32[2,128], index: 2, kind: input, shape index: {}]
  %s3 = inlined_call_operand.hbm [shape: f32[2,2,128], index: 3, kind: output, shape index: {}]
  %s4 = sld [smem:[#allocation0]]
  $region45: #{tpu_custom_call.1} parent=0
    _
  %s6 = ssub.s32 1, %s4
  %s7 = scalar_select 0, %s6, %s4
  %8 = sst [smem:[#allocation3]] %s0
  $region1: #{tpu_custom_call.1} parent=0
    #allocation4 [shape = 'u8[2048]{0}', space=vmem, size = 0x800, scoped, tag = 'input window, operand 1']
    #allocation5 [shape = 's32[2]{0}', space=sflag, size = 0x8, scoped, tag = 'scoped memory for tpu_custom_call.1']
    #allocation6 [shape = 's32[2]{0}', space=sflag, size = 0x8, scoped, tag = 'scoped memory for tpu_custom_call.1']
    #allocation7 [shape = 'u8[2048]{0}', space=vmem, size = 0x800, scoped, tag = 'output window, operand 0']
    %9 = vsyncpa [#allocation5], 0
    %s10 = scalar_lea.sflag [#allocation5], 1
    %11 = vsyncpa %s10, 0
    %12 = vsyncpa [#allocation6], 0
    %s13 = scalar_lea.sflag [#allocation6], 1
    %14 = vsyncpa %s13, 0
    loop: start=0, step=1, limit=4
    $region2: #{tpu_custom_call.1} parent=1 // loop_pre_header
      _
    $region3: #{tpu_custom_call.1} parent=1 // loop_header
      %s16 = sphi 0, %s20
      %p17 = scmp.ge.s32.totalorder %s16, 4
      %s23 = sphi 0, %s35
      %s24 = sphi 0, %s31
      %s25 = sphi 0, %s23
      %s26 = sphi 0, %s24
      %s27 = sphi 0, %s25
      %s28 = sphi 0, %s26
      %s40 = sphi 0, %s42
      %s43 = sphi 0, %s40
      %s44 = sphi 0, %s43
      %s60 = sphi 0, %s44
      %s66 = sphi 0, %s68
      %s69 = sphi 0, %s66
      %s70 = sphi 0, %s69
      %s86 = sphi 0, %s70
      %s94 = sphi 0, %s96
      %s97 = sphi 0, %s94
      %s98 = sphi 0, %s97
      %s114 = sphi 0, %s98
    $region4: #{tpu_custom_call.1} parent=1 // loop_header_branch
      %19 = sbr.rel (%p17) target = $region8
    $region5: #{tpu_custom_call.1} parent=1 // loop_body
      %s21 = ssub.s32 %s16, 1
      %s22 = ssub.s32 %s16, 2
      %s29 = sadd.s32 1, %s24
      %p30 = scmp.ge.s32.totalorder %s29, 2
      %s31 = scalar_select %p30, 0, %s29
      %s32 = sadd.s32 1, %s23
      %s33 = scalar_select %p30, %s32, %s23
      %p34 = scmp.ge.s32.totalorder %s33, 1
      %s35 = scalar_select %p34, 0, %s33
      %s36 = ssub.s32 %s24, %s31
      %s37 = ssub.s32 %s23, %s35
      %s38 = sor.u32 %s36, %s37
      %p39 = scmp.eq.s32.totalorder %s38, 0
      %s41 = sadd.s32 %s40, 1
      %s42 = scalar_select %p39, %s40, %s41
      %p45 = pneg %p39
      %p46 = scmp.eq.s32.totalorder %s16, 1
      %p47 = por %p45, %p46
      %p48 = scmp.ne.s32.totalorder %s40, %s43
      %p49 = scmp.eq.s32.totalorder %s16, 0
      %p50 = por %p48, %p49
      %p51 = scmp.ne.s32.totalorder %s40, %s43
      %p52 = scmp.eq.s32.totalorder %s21, 1
      %p53 = por %p51, %p52
      %p54 = scmp.ne.s32.totalorder %s43, %s44
      %p55 = scmp.eq.s32.totalorder %s21, 0
      %p56 = por %p54, %p55
      %p57 = scmp.ne.s32.totalorder %s43, %s44
      %p58 = scmp.eq.s32.totalorder %s22, 1
      %p59 = por %p57, %p58
      %p61 = scmp.ne.s32.totalorder %s44, %s60
      %p62 = scmp.eq.s32.totalorder %s22, 0
      %p63 = por %p61, %p62
      %s64 = ssub.s32 %s23, %s35
      %p65 = scmp.eq.s32.totalorder %s64, 0
      %s67 = sadd.s32 %s66, 1
      %s68 = scalar_select %p65, %s66, %s67
      %p71 = pneg %p65
      %p72 = scmp.eq.s32.totalorder %s16, 1
      %p73 = por %p71, %p72
      %p74 = scmp.ne.s32.totalorder %s66, %s69
      %p75 = scmp.eq.s32.totalorder %s16, 0
      %p76 = por %p74, %p75
      %p77 = scmp.ne.s32.totalorder %s66, %s69
      %p78 = scmp.eq.s32.totalorder %s21, 1
      %p79 = por %p77, %p78
      %p80 = scmp.ne.s32.totalorder %s69, %s70
      %p81 = scmp.eq.s32.totalorder %s21, 0
      %p82 = por %p80, %p81
      %p83 = scmp.ne.s32.totalorder %s69, %s70
      %p84 = scmp.eq.s32.totalorder %s22, 1
      %p85 = por %p83, %p84
      %p87 = scmp.ne.s32.totalorder %s70, %s86
      %p88 = scmp.eq.s32.totalorder %s22, 0
      %p89 = por %p87, %p88
      %s90 = ssub.s32 %s24, %s31
      %s91 = ssub.s32 %s23, %s35
      %s92 = sor.u32 %s90, %s91
      %p93 = scmp.eq.s32.totalorder %s92, 0
      %s95 = sadd.s32 %s94, 1
      %s96 = scalar_select %p93, %s94, %s95
      %p99 = pneg %p93
      %p100 = scmp.eq.s32.totalorder %s16, 1
      %p101 = por %p99, %p100
      %p102 = scmp.ne.s32.totalorder %s94, %s97
      %p103 = scmp.eq.s32.totalorder %s16, 0
      %p104 = por %p102, %p103
      %p105 = scmp.ne.s32.totalorder %s94, %s97
      %p106 = scmp.eq.s32.totalorder %s21, 1
      %p107 = por %p105, %p106
      %p108 = scmp.ne.s32.totalorder %s97, %s98
      %p109 = scmp.eq.s32.totalorder %s21, 0
      %p110 = por %p108, %p109
      %p111 = scmp.ne.s32.totalorder %s97, %s98
      %p112 = scmp.eq.s32.totalorder %s22, 1
      %p113 = por %p111, %p112
      %p115 = scmp.ne.s32.totalorder %s98, %s114
      %p116 = scmp.eq.s32.totalorder %s22, 0
      %p117 = por %p115, %p116
      %p118 = scmp.le.s32.totalorder 1, %s16
      %p119 = scmp.lt.s32.totalorder %s16, 3
      %p120 = pnand %p118, %p119
      %p121 = pneg %p120
      // Predicated region
      $region9: #{tpu_custom_call.1} parent=5 // pred_check
        _
      $region10: #{tpu_custom_call.1} parent=5 // pred_check_branch
        %123 = sbr.rel (%p120) target = $region12
      $region11: #{tpu_custom_call.1} parent=5 // pred_region
        %s124 = ssub.s32 %s16, 1
        // Predicated region
        $region13: #{tpu_custom_call.1} parent=11 // pred_check
          %p125 = pneg %p82
        $region14: #{tpu_custom_call.1} parent=11 // pred_check_branch
          %127 = sbr.rel (%p125) target = $region16
        $region15: #{tpu_custom_call.1} parent=11 // pred_region
          %p128 = scmp.lt.s32.totalorder %s25, 0
          %s129 = scalar_select %p128, %s25, 0
          %s130 = smul.addr %s129, 2
          %s131 = scalar_lea.vmem %s2, %s130
        $region16: #{tpu_custom_call.1} parent=11 // pred_fallthru
          _
      $region12: #{tpu_custom_call.1} parent=5 // pred_fallthru
        _
      %p132 = scmp.lt.s32.totalorder %s16, 2
      // Predicated region
      $region17: #{tpu_custom_call.1} parent=5 // pred_check
        %p133 = pneg %p132
      $region18: #{tpu_custom_call.1} parent=5 // pred_check_branch
        %135 = sbr.rel (%p133) target = $region20
      $region19: #{tpu_custom_call.1} parent=5 // pred_region
        // Predicated region
        $region21: #{tpu_custom_call.1} parent=19 // pred_check
          %p136 = pneg %p50
        $region22: #{tpu_custom_call.1} parent=19 // pred_check_branch
          %138 = sbr.rel (%p136) target = $region24
        $region23: #{tpu_custom_call.1} parent=19 // pred_region
          %s139 = sand.u32 %s40, 1
          %s140 = scalar_lea.sflag [#allocation5], %s139
          %s141 = sand.u32 %s40, 1
          %s142 = smul.addr %s141, 2
          %s143 = scalar_lea.vmem [#allocation4], %s142
          %s145 = ssub.s32 32, 32
          %146 = vsyncadd %s140, %s145
          %s147 = sadd.s32 %s23, %s24
          %s148 = smul.addr %s147, 32
          %s149 = scalar_lea.hbm %s1, %s148
          %s151 = sshll.u32 %s143, 4
          %s152 = int_to_ptr.vmem [resolvable:$true] %s151
          %154 = dma.hbm_to_vmem [thread:$0]  %s149, 32, %s152, %s140
        $region24: #{tpu_custom_call.1} parent=19 // pred_fallthru
          _
      $region20: #{tpu_custom_call.1} parent=5 // pred_fallthru
        _
      %p155 = scmp.le.s32.totalorder 1, %s16
      %p156 = scmp.lt.s32.totalorder %s16, 3
      %p157 = pnand %p155, %p156
      %p158 = pneg %p157
      // Predicated region
      $region25: #{tpu_custom_call.1} parent=5 // pred_check
        _
      $region26: #{tpu_custom_call.1} parent=5 // pred_check_branch
        %160 = sbr.rel (%p157) target = $region28
      $region27: #{tpu_custom_call.1} parent=5 // pred_region
        %s161 = ssub.s32 %s16, 1
        %s162 = sand.u32 %s43, 1
        %s163 = scalar_lea.sflag [#allocation5], %s162
        %s164 = sand.u32 %s43, 1
        %s165 = smul.addr %s164, 2
        %s166 = scalar_lea.vmem [#allocation4], %s165
        // Predicated region
        $region29: #{tpu_custom_call.1} parent=27 // pred_check
          %p167 = pneg %p56
        $region30: #{tpu_custom_call.1} parent=27 // pred_check_branch
          %169 = sbr.rel (%p167) target = $region32
        $region31: #{tpu_custom_call.1} parent=27 // pred_region
          %170 = dma.done %s163, 32
        $region32: #{tpu_custom_call.1} parent=27 // pred_fallthru
          _
        %s171 = sand.u32 %s43, 1
        %s172 = scalar_lea.sflag [#allocation5], %s171
        %s173 = sand.u32 %s43, 1
        %s174 = smul.addr %s173, 2
        %s175 = scalar_lea.vmem [#allocation4], %s174
        %p176 = pneg %p56
        %p177 = pneg %p53
        %p178 = scmp.lt.s32.totalorder %s25, 0
        %s179 = scalar_select %p178, %s25, 0
        %s180 = smul.addr %s179, 2
        %s181 = scalar_lea.vmem %s2, %s180
        %p182 = pneg %p82
        %p183 = pneg %p79
        %p184 = pneg %p110
        %p185 = pneg %p107
        %s186 = sand.u32 %s97, 1
        %s187 = scalar_lea.sflag [#allocation6], %s186
        %s188 = sand.u32 %s97, 1
        %s189 = smul.addr %s188, 2
        %s190 = scalar_lea.vmem [#allocation7], %s189
        %p191 = scmp.lt.s32.totalorder %s25, 0
        %s192 = scalar_select %p191, %s25, 0
        %s193 = smul.addr %s192, 2
        %s194 = scalar_lea.vmem %s2, %s193
        %v195 = vld [vmem:[%s166] sm:$0x3]
        %v196 = vld [vmem:[%s194] sm:$0x3]
        %v197 = vadd.f32 %v195, %v196
        %198 = vst [vmem:[%s190] sm:$0x3] %v197
        %s199 = sand.u32 %s97, 1
        %s200 = scalar_lea.sflag [#allocation6], %s199
        %s201 = sand.u32 %s97, 1
        %s202 = smul.addr %s201, 2
        %s203 = scalar_lea.vmem [#allocation7], %s202
        // Predicated region
        $region33: #{tpu_custom_call.1} parent=27 // pred_check
          %p204 = pneg %p107
        $region34: #{tpu_custom_call.1} parent=27 // pred_check_branch
          %206 = sbr.rel (%p204) target = $region36
        $region35: #{tpu_custom_call.1} parent=27 // pred_region
          %s208 = ssub.s32 32, 32
          %209 = vsyncadd %s200, %s208
          %s210 = sadd.s32 %s25, %s26
          %s211 = smul.addr %s210, 32
          %s212 = scalar_lea.hbm %s3, %s211
          %s214 = sshll.u32 %s203, 4
          %s215 = int_to_ptr.vmem [resolvable:$true] %s214
          %217 = dma.vmem_to_hbm [thread:$0]  %s215, 32, %s212, %s200
        $region36: #{tpu_custom_call.1} parent=27 // pred_fallthru
          _
      $region28: #{tpu_custom_call.1} parent=5 // pred_fallthru
        _
      %p218 = scmp.le.s32.totalorder 2, %s16
      // Predicated region
      $region37: #{tpu_custom_call.1} parent=5 // pred_check
        %p219 = pneg %p218
      $region38: #{tpu_custom_call.1} parent=5 // pred_check_branch
        %221 = sbr.rel (%p219) target = $region40
      $region39: #{tpu_custom_call.1} parent=5 // pred_region
        %s222 = ssub.s32 %s16, 2
        // Predicated region
        $region41: #{tpu_custom_call.1} parent=39 // pred_check
          %p223 = pneg %p113
        $region42: #{tpu_custom_call.1} parent=39 // pred_check_branch
          %225 = sbr.rel (%p223) target = $region44
        $region43: #{tpu_custom_call.1} parent=39 // pred_region
          %s226 = sand.u32 %s98, 1
          %s227 = scalar_lea.sflag [#allocation6], %s226
          %s228 = sand.u32 %s98, 1
          %s229 = smul.addr %s228, 2
          %s230 = scalar_lea.vmem [#allocation7], %s229
          %231 = dma.done %s227, 32
        $region44: #{tpu_custom_call.1} parent=39 // pred_fallthru
          _
      $region40: #{tpu_custom_call.1} parent=5 // pred_fallthru
        _
    $region6: #{tpu_custom_call.1} parent=1 // loop_footer
      %s20 = sadd.s32 1, %s16
    $region7: #{tpu_custom_call.1} parent=1 // loop_footer_branch
      %15 = sbr.rel target = $region3
    $region8: #{tpu_custom_call.1} parent=1 // loop_exit
      _
    %232 = vsyncpa [#allocation5], 1
    %s233 = scalar_lea.sflag [#allocation5], 1
    %234 = vsyncpa %s233, 1
    %235 = vsyncpa [#allocation6], 1
    %s236 = scalar_lea.sflag [#allocation6], 1
    %237 = vsyncpa %s236, 1

</llo_original>
